<compile_context>
chip_gen: v5e
topology: v5e:2x2
jax: 0.10.0
libtpu: 0.0.40
codegen_flags: <defaults>
</compile_context>

<pallas_src>
import jax
import jax.numpy as jnp
import numpy as np
from jax.experimental import pallas as pl
from jax.experimental.pallas import tpu as pltpu

_VMEM_LIMIT = 48 * 1024 * 1024   # leave headroom on v7x's 64 MiB physical VMEM
_LANE = 128
_SUBLANE = 8
_MAX_TM = 256                    # dst-row tile (multiple of 8; 256 fits all gens)


def _round_up(x, m):
    return (x + m - 1) // m * m


def _node_tiling(num_node):
    n_pad = _round_up(max(num_node, _SUBLANE), _SUBLANE)
    tm = min(_MAX_TM, n_pad)                 # tm == n_pad (full) or a multiple of 128
    n_pad = _round_up(n_pad, tm)
    return tm, n_pad


# ----------------------------- Pallas kernels ------------------------------ #

def _rel_project_kernel(x_ref, w_ref, y_ref):
    """Y[r, tile] = X[tile] @ Wr[r]  (bf16 output, f32 MXU accumulation)."""
    y_ref[0] = jnp.dot(x_ref[...], w_ref[0],
                       preferred_element_type=jnp.float32).astype(y_ref.dtype)


def _self_project_kernel(x_ref, w_ref, b_ref, z_ref):
    """Z[tile] = X[tile] @ Ws + b  (f32, used to initialize the accumulator)."""
    z_ref[...] = (jnp.dot(x_ref[...], w_ref[...],
                          preferred_element_type=jnp.float32) + b_ref[...])


def _gearnet_layer_kernel(a_ref, y_ref, z_ref, o_ref):
    """One GeometricRelationalGraphConv layer.

    Grid = (num_dst_tiles [parallel], num_relation [arbitrary/reduction]).
      a_ref: (1, TM, N)   bf16 adjacency panel for relation r, dst-rows of tile i
      y_ref: (1, N, dout) bf16 precomputed X @ Wr[r]
      z_ref: (TM, dout)   f32  precomputed X @ Ws + bias (tile i)
      o_ref: (TM, dout)   f32  output tile, resident across r (accumulator)
    """
    r = pl.program_id(1)

    @pl.when(r == 0)
    def _():
        o_ref[...] = z_ref[...]

    o_ref[...] += jnp.dot(a_ref[0], y_ref[0],
                          preferred_element_type=jnp.float32)

    @pl.when(r == pl.num_programs(1) - 1)
    def _():
        o_ref[...] = jnp.maximum(o_ref[...], 0.0)     # activation = ReLU


def _readout_kernel(p_ref, x_ref, o_ref):
    """Sum readout, tiled over node chunks: (G, TM) @ (TM, D) accumulated in o_ref."""
    @pl.when(pl.program_id(0) == 0)
    def _():
        o_ref[...] = jnp.zeros_like(o_ref)

    o_ref[...] += jnp.dot(p_ref[...], x_ref[...],
                          preferred_element_type=jnp.float32)


# ------------------------------ JAX wrappers ------------------------------- #

def gearnet_conv_layer(a_bf16, x_pad, w_rel, b_rel, w_self, b_self, tm):
    """a_bf16: (R, N_pad, N_pad) bf16; x_pad: (N_pad, din_pad) f32 (zero padded)."""
    R, n_pad, _ = a_bf16.shape
    dout = w_self.shape[0]
    din = w_self.shape[1]
    din_pad = x_pad.shape[1]
    dout_pad = _round_up(dout, _LANE)
    n_tiles = n_pad // tm

    # torch Linear: y = x @ W^T + b  -> pre-transpose and zero-pad to lane-dense dims.
    wr = jnp.transpose(w_rel.reshape(dout, R, din), (1, 2, 0))          # (R, din, dout)
    wr = jnp.pad(wr, ((0, 0), (0, din_pad - din), (0, dout_pad - dout)))
    ws = jnp.pad(w_self.T, ((0, din_pad - din), (0, dout_pad - dout)))  # (din_p, dout_p)
    bias = jnp.pad(b_rel + b_self, (0, dout_pad - dout)).reshape(1, dout_pad)

    # (1) per-relation projection Y[r] = X @ Wr[r]   (streamed back to HBM as bf16)
    y = pl.pallas_call(
        _rel_project_kernel,
        out_shape=jax.ShapeDtypeStruct((R, n_pad, dout_pad), jnp.bfloat16),
        grid_spec=pltpu.PrefetchScalarGridSpec(
            num_scalar_prefetch=0,
            grid=(n_tiles, R),
            in_specs=[
                pl.BlockSpec((tm, din_pad), lambda i, r: (i, 0)),
                pl.BlockSpec((1, din_pad, dout_pad), lambda i, r: (r, 0, 0)),
            ],
            out_specs=pl.BlockSpec((1, tm, dout_pad), lambda i, r: (r, i, 0)),
        ),
        compiler_params=pltpu.CompilerParams(
            dimension_semantics=("parallel", "parallel"),
            vmem_limit_bytes=_VMEM_LIMIT),
    )(x_pad, wr)

    # (2) self term Z = X @ Ws + bias   (f32, accumulator init value)
    z = pl.pallas_call(
        _self_project_kernel,
        out_shape=jax.ShapeDtypeStruct((n_pad, dout_pad), jnp.float32),
        grid_spec=pltpu.PrefetchScalarGridSpec(
            num_scalar_prefetch=0,
            grid=(n_tiles,),
            in_specs=[
                pl.BlockSpec((tm, din_pad), lambda i: (i, 0)),
                pl.BlockSpec((din_pad, dout_pad), lambda i: (0, 0)),
                pl.BlockSpec((1, dout_pad), lambda i: (0, 0)),
            ],
            out_specs=pl.BlockSpec((tm, dout_pad), lambda i: (i, 0)),
        ),
        compiler_params=pltpu.CompilerParams(
            dimension_semantics=("parallel",),
            vmem_limit_bytes=_VMEM_LIMIT),
    )(x_pad, ws, bias)

    # (3) relational aggregation: out[i] = relu( Z[i] + sum_r A[r, i-tile] @ Y[r] )
    hidden = pl.pallas_call(
        _gearnet_layer_kernel,
        out_shape=jax.ShapeDtypeStruct((n_pad, dout_pad), jnp.float32),
        grid_spec=pltpu.PrefetchScalarGridSpec(
            num_scalar_prefetch=0,
            grid=(n_tiles, R),
            in_specs=[
                pl.BlockSpec((1, tm, n_pad), lambda i, r: (r, i, 0)),
                pl.BlockSpec((1, n_pad, dout_pad), lambda i, r: (r, 0, 0)),
                pl.BlockSpec((tm, dout_pad), lambda i, r: (i, 0)),
            ],
            out_specs=pl.BlockSpec((tm, dout_pad), lambda i, r: (i, 0)),
        ),
        compiler_params=pltpu.CompilerParams(
            dimension_semantics=("parallel", "arbitrary"),
            vmem_limit_bytes=_VMEM_LIMIT),
    )(a_bf16, y, z)
    return hidden


def sum_readout(pool_pad, node_feat_pad, tm):
    """SumReadout as a tiled pooling matmul reduction over node chunks."""
    G, n_pad = pool_pad.shape
    d = node_feat_pad.shape[1]
    n_tiles = n_pad // tm
    return pl.pallas_call(
        _readout_kernel,
        out_shape=jax.ShapeDtypeStruct((G, d), jnp.float32),
        grid_spec=pltpu.PrefetchScalarGridSpec(
            num_scalar_prefetch=0,
            grid=(n_tiles,),
            in_specs=[
                pl.BlockSpec((G, tm), lambda i: (0, i)),
                pl.BlockSpec((tm, d), lambda i: (i, 0)),
            ],
            out_specs=pl.BlockSpec((G, d), lambda i: (0, 0)),
        ),
        compiler_params=pltpu.CompilerParams(
            dimension_semantics=("arbitrary",),
            vmem_limit_bytes=_VMEM_LIMIT),
    )(pool_pad, node_feat_pad)


def gearnet_forward(params, edge_list, edge_weight, node2graph,
                    num_node, num_relation, num_graph, x):
    """Full CG22_GearNet forward (defaults: no angle bins, no short_cut/BN/concat)."""
    src, dst, rel = edge_list[:, 0], edge_list[:, 1], edge_list[:, 2]
    tm, n_pad = _node_tiling(num_node)

    # Dense relational adjacency A[r, dst, src]: built in f32, streamed as bf16.
    # TODO(synk): replace with a sparse CSR gather kernel (scalar-prefetch row
    #             offsets) for realistic protein graphs where E << N^2.
    a = jnp.zeros((num_relation, n_pad, n_pad), jnp.float32)
    a = a.at[rel, dst, src].add(edge_weight)
    a_bf16 = a.astype(jnp.bfloat16)

    # Readout pooling matrix P[g, n] = [node n belongs to graph g] (zero for pad rows).
    pool = (node2graph[None, :] == jnp.arange(num_graph)[:, None]).astype(jnp.float32)
    pool_pad = jnp.pad(pool, ((0, 0), (0, n_pad - num_node)))

    din = x.shape[1]
    din_pad = _round_up(din, _LANE)
    layer_input = jnp.pad(x, ((0, n_pad - num_node), (0, din_pad - din)))

    hidden = layer_input
    out_dim = din
    for (w_rel, b_rel, w_self, b_self) in params:
        hidden = gearnet_conv_layer(a_bf16, layer_input, w_rel, b_rel,
                                    w_self, b_self, tm)
        layer_input = hidden                     # concat_hidden=False, short_cut=False
        out_dim = w_self.shape[0]

    node_feature = hidden[:num_node, :out_dim]
    graph_feature = sum_readout(pool_pad, hidden, tm)[:, :out_dim]
    return {"graph_feature": graph_feature, "node_feature": node_feature}


# ----------------------------- pure-JAX reference --------------------------- #

def gearnet_reference(params, edge_list, edge_weight, node2graph,
                      num_node, num_relation, num_graph, x):
    src, dst, rel = edge_list[:, 0], edge_list[:, 1], edge_list[:, 2]
    layer_input = x
    for (w_rel, b_rel, w_self, b_self) in params:
        din = layer_input.shape[1]
        message = layer_input[src] * edge_weight[:, None]
        node_out = dst * num_relation + rel
        update = jax.ops.segment_sum(message, node_out,
                                     num_segments=num_node * num_relation)
        update = update.reshape(num_node, num_relation * din)
        hidden = update @ w_rel.T + b_rel + layer_input @ w_self.T + b_self
        hidden = jnp.maximum(hidden, 0.0)
        layer_input = hidden
    node_feature = layer_input
    graph_feature = jax.ops.segment_sum(node_feature, node2graph,
                                        num_segments=num_graph)
    return graph_feature, node_feature


# ---------------------------------- main ----------------------------------- #

if __name__ == "__main__":
    key = jax.random.PRNGKey(0)

    # Small synthetic graph batch.
    num_graph = 2
    nodes_per_graph = 8
    num_node = num_graph * nodes_per_graph          # 16
    num_relation = 4
    num_edge = 48
    input_dim = 16
    hidden_dims = [32, 32]
    dims = [input_dim] + hidden_dims

    k = iter(jax.random.split(key, 16))

    # Graph structure (edges constrained within each graph, like torchdrug batching).
    graph_of_edge = jax.random.randint(next(k), (num_edge,), 0, num_graph)
    src = jax.random.randint(next(k), (num_edge,), 0, nodes_per_graph) \
        + graph_of_edge * nodes_per_graph
    dst = jax.random.randint(next(k), (num_edge,), 0, nodes_per_graph) \
        + graph_of_edge * nodes_per_graph
    rel = jax.random.randint(next(k), (num_edge,), 0, num_relation)
    edge_list = jnp.stack([src, dst, rel], axis=1)
    edge_weight = jax.random.uniform(next(k), (num_edge,), jnp.float32, 0.5, 1.5)
    node2graph = jnp.repeat(jnp.arange(num_graph), nodes_per_graph)

    # Input node features.
    x = jax.random.normal(next(k), (num_node, input_dim), jnp.float32)

    # Deterministic layer parameters (same shapes as the nn.Module's Linears).
    params = []
    for i in range(len(dims) - 1):
        din, dout = dims[i], dims[i + 1]
        w_rel = jax.random.normal(next(k), (dout, num_relation * din), jnp.float32) * 0.05
        b_rel = jax.random.normal(next(k), (dout,), jnp.float32) * 0.05
        w_self = jax.random.normal(next(k), (dout, din), jnp.float32) * 0.05
        b_self = jax.random.normal(next(k), (dout,), jnp.float32) * 0.05
        params.append((w_rel, b_rel, w_self, b_self))

    # Run the Pallas forward.
    out = gearnet_forward(params, edge_list, edge_weight, node2graph,
                          num_node, num_relation, num_graph, x)
    jax.block_until_ready(out)

    # Correctness check against the exact-f32 pure-JAX reference. The adjacency
    # and per-relation projections are streamed in bf16 (with f32 accumulation),
    # so the comparison uses a bf16-commensurate tolerance.
    ref_graph, ref_node = gearnet_reference(
        params, edge_list, edge_weight, node2graph,
        num_node, num_relation, num_graph, x)
    np.testing.assert_allclose(np.asarray(out["node_feature"]),
                               np.asarray(ref_node), rtol=5e-2, atol=5e-2)
    np.testing.assert_allclose(np.asarray(out["graph_feature"]),
                               np.asarray(ref_graph), rtol=5e-2, atol=5e-2)

    print("KERNEL_OK")
</pallas_src>

<mosaic_0001>
module attributes {stable_mosaic.version = 11 : i64} {
  func.func @_rel_project_kernel(%arg0: i32, %arg1: i32, %arg2: memref<16x128xf32, #tpu.memory_space<vmem>>, %arg3: memref<1x128x128xf32, #tpu.memory_space<vmem>>, %arg4: memref<1x16x128xbf16, #tpu.memory_space<vmem>>) attributes {dimension_semantics = [#tpu.dimension_semantics<parallel>, #tpu.dimension_semantics<parallel>], iteration_bounds = array<i64: 1, 4>, scalar_prefetch = 0 : i64, scratch_operands = 0 : i64, tpu.core_type = #tpu.core_type<tc>, window_params = [{transform_indices = @transform_0, window_bounds = array<i64: 16, 128>}, {transform_indices = @transform_1, window_bounds = array<i64: 1, 128, 128>}, {transform_indices = @transform_2, window_bounds = array<i64: 1, 16, 128>}]} {
    %c0 = arith.constant 0 : index
    %c0_0 = arith.constant 0 : index
    %0 = vector.load %arg2[%c0, %c0_0] : memref<16x128xf32, #tpu.memory_space<vmem>>, vector<16x128xf32>
    %c0_1 = arith.constant 0 : index
    %c0_2 = arith.constant 0 : index
    %c0_3 = arith.constant 0 : index
    %1 = vector.load %arg3[%c0_1, %c0_2, %c0_3] : memref<1x128x128xf32, #tpu.memory_space<vmem>>, vector<1x128x128xf32>
    %2 = vector.shape_cast %1 : vector<1x128x128xf32> to vector<128x128xf32>
    %cst = arith.constant dense<0.000000e+00> : vector<16x128xf32>
    %3 = tpu.matmul %0, %2, %cst {dimension_numbers = #tpu.dot_dimension_numbers<[1], [0], [0], [1], [0, 0, 1, 1], [], []>} : vector<16x128xf32>, vector<128x128xf32>, vector<16x128xf32> -> vector<16x128xf32>
    %4 = arith.truncf %3 : vector<16x128xf32> to vector<16x128xbf16>
    %c0_4 = arith.constant 0 : index
    %c0_5 = arith.constant 0 : index
    %c0_6 = arith.constant 0 : index
    %5 = vector.load %arg4[%c0_4, %c0_5, %c0_6] : memref<1x16x128xbf16, #tpu.memory_space<vmem>>, vector<1x16x128xbf16>
    %6 = vector.shape_cast %5 : vector<1x16x128xbf16> to vector<16x128xbf16>
    %7 = vector.shape_cast %4 : vector<16x128xbf16> to vector<1x16x128xbf16>
    tpu.vector_store %arg4[%c0_4, %c0_5, %c0_6], %7 {strides = array<i32>} : memref<1x16x128xbf16, #tpu.memory_space<vmem>>, vector<1x16x128xbf16>,
    return
  }
  func.func @transform_0(%arg0: i32, %arg1: i32) -> (i32, i32) {
    %c0_i32 = arith.constant 0 : i32
    %c0_i32_0 = arith.constant 0 : i32
    return %arg0, %c0_i32 : i32, i32
  }
  func.func @transform_1(%arg0: i32, %arg1: i32) -> (i32, i32, i32) {
    %c0_i32 = arith.constant 0 : i32
    %c0_i32_0 = arith.constant 0 : i32
    %c0_i32_1 = arith.constant 0 : i32
    return %arg1, %c0_i32, %c0_i32_0 : i32, i32, i32
  }
  func.func @transform_2(%arg0: i32, %arg1: i32) -> (i32, i32, i32) {
    %c0_i32 = arith.constant 0 : i32
    %c0_i32_0 = arith.constant 0 : i32
    return %arg1, %arg0, %c0_i32 : i32, i32, i32
  }
}

</mosaic_0001>

<llo_original>
// kernel: tpu_custom_call.1
$region0: #{tpu_custom_call.1}
  #allocation0 [shape = 'u32[]', space=smem, size = 0x4, offset = 0x4, fixed_abs, tag = 'smem constant byte address 0x4 - core index']
  #allocation1 [shape = 'u32[72,128]{1,0:T(1,128)}', space=vmem, size = 0x9000, scoped, tag = 'internal scratch']
  %s0 = inlined_call_operand.hbm [shape: f32[16,128], index: 0, kind: input, shape index: {}]
  %s1 = inlined_call_operand.hbm [shape: f32[4,128,128], index: 1, kind: input, shape index: {}]
  %s2 = inlined_call_operand.hbm [shape: bf16[4,16,128], index: 2, kind: output, shape index: {}]
  %s3 = sld [smem:[#allocation0]]
  $region49: #{tpu_custom_call.1} parent=0
    _
  %s5 = ssub.s32 1, %s3
  %s6 = scalar_select 0, %s5, %s3
  $region1: #{tpu_custom_call.1} parent=0
    #allocation2 [shape = 'u8[8192]{0}', space=vmem, size = 0x2000, scoped, tag = 'input window, operand 0, single buffered']
    #allocation3 [shape = 's32[2]{0}', space=sflag, size = 0x8, scoped, tag = 'scoped memory for tpu_custom_call.1']
    #allocation4 [shape = 's32[2]{0}', space=sflag, size = 0x8, scoped, tag = 'scoped memory for tpu_custom_call.1']
    #allocation5 [shape = 'u8[131072]{0}', space=vmem, size = 0x20000, scoped, tag = 'input window, operand 1']
    #allocation6 [shape = 's32[2]{0}', space=sflag, size = 0x8, scoped, tag = 'scoped memory for tpu_custom_call.1']
    #allocation7 [shape = 'u8[8192]{0}', space=vmem, size = 0x2000, scoped, tag = 'output window, operand 0']
    %7 = vsyncpa [#allocation3], 0
    %8 = vsyncpa [#allocation6], 0
    %s9 = scalar_lea.sflag [#allocation6], 1
    %10 = vsyncpa %s9, 0
    %11 = vsyncpa [#allocation4], 0
    %s12 = scalar_lea.sflag [#allocation4], 1
    %13 = vsyncpa %s12, 0
    loop: start=0, step=1, limit=6
    $region2: #{tpu_custom_call.1} parent=1 // loop_pre_header
      _
    $region3: #{tpu_custom_call.1} parent=1 // loop_header
      %s15 = sphi 0, %s19
      %p16 = scmp.ge.s32.totalorder %s15, 6
      %s22 = sphi 0, %s34
      %s23 = sphi 0, %s30
      %s24 = sphi 0, %s22
      %s25 = sphi 0, %s23
      %s26 = sphi 0, %s24
      %s27 = sphi 0, %s25
      %s37 = sphi 0, %s39
      %s40 = sphi 0, %s37
      %s41 = sphi 0, %s40
      %s57 = sphi 0, %s41
      %s63 = sphi 0, %s65
      %s66 = sphi 0, %s63
      %s67 = sphi 0, %s66
      %s83 = sphi 0, %s67
      %s91 = sphi 0, %s93
      %s94 = sphi 0, %s91
      %s95 = sphi 0, %s94
      %s111 = sphi 0, %s95
    $region4: #{tpu_custom_call.1} parent=1 // loop_header_branch
      %18 = sbr.rel (%p16) target = $region8
    $region5: #{tpu_custom_call.1} parent=1 // loop_body
      %s20 = ssub.s32 %s15, 1
      %s21 = ssub.s32 %s15, 2
      %s28 = sadd.s32 1, %s23
      %p29 = scmp.ge.s32.totalorder %s28, 4
      %s30 = scalar_select %p29, 0, %s28
      %s31 = sadd.s32 1, %s22
      %s32 = scalar_select %p29, %s31, %s22
      %p33 = scmp.ge.s32.totalorder %s32, 1
      %s34 = scalar_select %p33, 0, %s32
      %s35 = ssub.s32 %s22, %s34
      %p36 = scmp.eq.s32.totalorder %s35, 0
      %s38 = sadd.s32 %s37, 1
      %s39 = scalar_select %p36, %s37, %s38
      %p42 = pneg %p36
      %p43 = scmp.eq.s32.totalorder %s15, 3
      %p44 = por %p42, %p43
      %p45 = scmp.ne.s32.totalorder %s37, %s40
      %p46 = scmp.eq.s32.totalorder %s15, 0
      %p47 = por %p45, %p46
      %p48 = scmp.ne.s32.totalorder %s37, %s40
      %p49 = scmp.eq.s32.totalorder %s20, 3
      %p50 = por %p48, %p49
      %p51 = scmp.ne.s32.totalorder %s40, %s41
      %p52 = scmp.eq.s32.totalorder %s20, 0
      %p53 = por %p51, %p52
      %p54 = scmp.ne.s32.totalorder %s40, %s41
      %p55 = scmp.eq.s32.totalorder %s21, 3
      %p56 = por %p54, %p55
      %p58 = scmp.ne.s32.totalorder %s41, %s57
      %p59 = scmp.eq.s32.totalorder %s21, 0
      %p60 = por %p58, %p59
      %s61 = ssub.s32 %s23, %s30
      %p62 = scmp.eq.s32.totalorder %s61, 0
      %s64 = sadd.s32 %s63, 1
      %s65 = scalar_select %p62, %s63, %s64
      %p68 = pneg %p62
      %p69 = scmp.eq.s32.totalorder %s15, 3
      %p70 = por %p68, %p69
      %p71 = scmp.ne.s32.totalorder %s63, %s66
      %p72 = scmp.eq.s32.totalorder %s15, 0
      %p73 = por %p71, %p72
      %p74 = scmp.ne.s32.totalorder %s63, %s66
      %p75 = scmp.eq.s32.totalorder %s20, 3
      %p76 = por %p74, %p75
      %p77 = scmp.ne.s32.totalorder %s66, %s67
      %p78 = scmp.eq.s32.totalorder %s20, 0
      %p79 = por %p77, %p78
      %p80 = scmp.ne.s32.totalorder %s66, %s67
      %p81 = scmp.eq.s32.totalorder %s21, 3
      %p82 = por %p80, %p81
      %p84 = scmp.ne.s32.totalorder %s67, %s83
      %p85 = scmp.eq.s32.totalorder %s21, 0
      %p86 = por %p84, %p85
      %s87 = ssub.s32 %s23, %s30
      %s88 = ssub.s32 %s22, %s34
      %s89 = sor.u32 %s87, %s88
      %p90 = scmp.eq.s32.totalorder %s89, 0
      %s92 = sadd.s32 %s91, 1
      %s93 = scalar_select %p90, %s91, %s92
      %p96 = pneg %p90
      %p97 = scmp.eq.s32.totalorder %s15, 3
      %p98 = por %p96, %p97
      %p99 = scmp.ne.s32.totalorder %s91, %s94
      %p100 = scmp.eq.s32.totalorder %s15, 0
      %p101 = por %p99, %p100
      %p102 = scmp.ne.s32.totalorder %s91, %s94
      %p103 = scmp.eq.s32.totalorder %s20, 3
      %p104 = por %p102, %p103
      %p105 = scmp.ne.s32.totalorder %s94, %s95
      %p106 = scmp.eq.s32.totalorder %s20, 0
      %p107 = por %p105, %p106
      %p108 = scmp.ne.s32.totalorder %s94, %s95
      %p109 = scmp.eq.s32.totalorder %s21, 3
      %p110 = por %p108, %p109
      %p112 = scmp.ne.s32.totalorder %s95, %s111
      %p113 = scmp.eq.s32.totalorder %s21, 0
      %p114 = por %p112, %p113
      %p115 = scmp.le.s32.totalorder 1, %s15
      %p116 = scmp.lt.s32.totalorder %s15, 5
      %p117 = pnand %p115, %p116
      %p118 = pneg %p117
      // Predicated region
      $region9: #{tpu_custom_call.1} parent=5 // pred_check
        _
      $region10: #{tpu_custom_call.1} parent=5 // pred_check_branch
        %120 = sbr.rel (%p117) target = $region12
      $region11: #{tpu_custom_call.1} parent=5 // pred_region
        %s121 = ssub.s32 %s15, 1
        // Predicated region
        $region13: #{tpu_custom_call.1} parent=11 // pred_check
          %p122 = pneg %p53
        $region14: #{tpu_custom_call.1} parent=11 // pred_check_branch
          %124 = sbr.rel (%p122) target = $region16
        $region15: #{tpu_custom_call.1} parent=11 // pred_region
          %s125 = smul.u32 2, %s24
          %127 = vsyncadd [#allocation3], 0
          %s128 = smul.addr %s125, 8
          %s129 = scalar_lea.hbm %s0, %s128
          %s130 = sshll.u32 %s129, 4
          %s131 = int_to_ptr.hbm [resolvable:$true] %s130
          %s132 = sshll.u32 [#allocation2], 4
          %s133 = int_to_ptr.vmem [resolvable:$true] %s132
          %138 = dma.hbm_to_vmem [thread:$0]  %s131, 256, %s133, [#allocation3], 128, 128, 8
        $region16: #{tpu_custom_call.1} parent=11 // pred_fallthru
          _
      $region12: #{tpu_custom_call.1} parent=5 // pred_fallthru
        _
      %p139 = scmp.lt.s32.totalorder %s15, 4
      // Predicated region
      $region17: #{tpu_custom_call.1} parent=5 // pred_check
        %p140 = pneg %p139
      $region18: #{tpu_custom_call.1} parent=5 // pred_check_branch
        %142 = sbr.rel (%p140) target = $region20
      $region19: #{tpu_custom_call.1} parent=5 // pred_region
        // Predicated region
        $region21: #{tpu_custom_call.1} parent=19 // pred_check
          %p143 = pneg %p73
        $region22: #{tpu_custom_call.1} parent=19 // pred_check_branch
          %145 = sbr.rel (%p143) target = $region24
        $region23: #{tpu_custom_call.1} parent=19 // pred_region
          %s146 = sand.u32 %s63, 1
          %s147 = scalar_lea.sflag [#allocation6], %s146
          %s148 = sand.u32 %s63, 1
          %s149 = smul.addr %s148, 128
          %s150 = scalar_lea.vmem [#allocation5], %s149
          %152 = vsyncadd %s147, 0
          %s153 = smul.addr %s23, 16
          %s154 = smul.addr %s153, 8
          %s155 = scalar_lea.hbm %s1, %s154
          %s156 = sshll.u32 %s155, 4
          %s157 = int_to_ptr.hbm [resolvable:$true] %s156
          %s158 = sshll.u32 %s150, 4
          %s159 = int_to_ptr.vmem [resolvable:$true] %s158
          %164 = dma.hbm_to_vmem [thread:$0]  %s157, 2048, %s159, %s147, 128, 128, 8
        $region24: #{tpu_custom_call.1} parent=19 // pred_fallthru
          _
      $region20: #{tpu_custom_call.1} parent=5 // pred_fallthru
        _
      %p165 = scmp.le.s32.totalorder 1, %s15
      %p166 = scmp.lt.s32.totalorder %s15, 5
      %p167 = pnand %p165, %p166
      %p168 = pneg %p167
      // Predicated region
      $region25: #{tpu_custom_call.1} parent=5 // pred_check
        _
      $region26: #{tpu_custom_call.1} parent=5 // pred_check_branch
        %170 = sbr.rel (%p167) target = $region28
      $region27: #{tpu_custom_call.1} parent=5 // pred_region
        %s171 = ssub.s32 %s15, 1
        // Predicated region
        $region29: #{tpu_custom_call.1} parent=27 // pred_check
          %p172 = pneg %p53
        $region30: #{tpu_custom_call.1} parent=27 // pred_check_branch
          %174 = sbr.rel (%p172) target = $region32
        $region31: #{tpu_custom_call.1} parent=27 // pred_region
          %176 = dma.done [#allocation3], 256
        $region32: #{tpu_custom_call.1} parent=27 // pred_fallthru
          _
        %s177 = sand.u32 %s66, 1
        %s178 = scalar_lea.sflag [#allocation6], %s177
        %s179 = sand.u32 %s66, 1
        %s180 = smul.addr %s179, 128
        %s181 = scalar_lea.vmem [#allocation5], %s180
        // Predicated region
        $region33: #{tpu_custom_call.1} parent=27 // pred_check
          %p182 = pneg %p79
        $region34: #{tpu_custom_call.1} parent=27 // pred_check_branch
          %184 = sbr.rel (%p182) target = $region36
        $region35: #{tpu_custom_call.1} parent=27 // pred_region
          %186 = dma.done %s178, 2048
        $region36: #{tpu_custom_call.1} parent=27 // pred_fallthru
          _
        %p187 = pneg %p53
        %p188 = pneg %p50
        %s189 = sand.u32 %s66, 1
        %s190 = scalar_lea.sflag [#allocation6], %s189
        %s191 = sand.u32 %s66, 1
        %s192 = smul.addr %s191, 128
        %s193 = scalar_lea.vmem [#allocation5], %s192
        %p194 = pneg %p79
        %p195 = pneg %p76
        %p196 = pneg %p107
        %p197 = pneg %p104
        %s198 = sand.u32 %s94, 1
        %s199 = scalar_lea.sflag [#allocation4], %s198
        %s200 = sand.u32 %s94, 1
        %s201 = smul.addr %s200, 8
        %s202 = scalar_lea.vmem [#allocation7], %s201
        %s203 = smul.u32 2, %s24
        %s204 = smul.u32 2, %s24
        %v205 = vld [vmem:[#allocation2] sm:$0xff]
        %v206 = vld [vmem:[#allocation2 + $0x8] sm:$0xff]
        %v207 = vld [vmem:[%s181] sm:$0xff]
        %v208 = vld [vmem:[%s181 + $0x8] sm:$0xff]
        %v209 = vld [vmem:[%s181 + $0x10] sm:$0xff]
        %v210 = vld [vmem:[%s181 + $0x18] sm:$0xff]
        %v211 = vld [vmem:[%s181 + $0x20] sm:$0xff]
        %v212 = vld [vmem:[%s181 + $0x28] sm:$0xff]
        %v213 = vld [vmem:[%s181 + $0x30] sm:$0xff]
        %v214 = vld [vmem:[%s181 + $0x38] sm:$0xff]
        %v215 = vld [vmem:[%s181 + $0x40] sm:$0xff]
        %v216 = vld [vmem:[%s181 + $0x48] sm:$0xff]
        %v217 = vld [vmem:[%s181 + $0x50] sm:$0xff]
        %v218 = vld [vmem:[%s181 + $0x58] sm:$0xff]
        %v219 = vld [vmem:[%s181 + $0x60] sm:$0xff]
        %v220 = vld [vmem:[%s181 + $0x68] sm:$0xff]
        %v221 = vld [vmem:[%s181 + $0x70] sm:$0xff]
        %v222 = vld [vmem:[%s181 + $0x78] sm:$0xff]
        %223 = vmatpush.msra.mxu0 %v222
        %224 = vmatpush.msra.mxu0 %v221
        %225 = vmatpush.msra.mxu0 %v220
        %226 = vmatpush.msra.mxu0 %v219
        %227 = vmatpush.msra.mxu0 %v218
        %228 = vmatpush.msra.mxu0 %v217
        %229 = vmatpush.msra.mxu0 %v216
        %230 = vmatpush.msra.mxu0 %v215
        %231 = vmatpush.msra.mxu0 %v214
        %232 = vmatpush.msra.mxu0 %v213
        %233 = vmatpush.msra.mxu0 %v212
        %234 = vmatpush.msra.mxu0 %v211
        %235 = vmatpush.msra.mxu0 %v210
        %236 = vmatpush.msra.mxu0 %v209
        %237 = vmatpush.msra.mxu0 %v208
        %238 = vmatpush.msra.mxu0 %v207
        %239 = vmatmul.f32.gmra.mxu0 %v205
        %v240 = vpop.f32.mrf.mxu0
        %v241 = vadd.f32 0.0, %v240
        %242 = vmatmul.f32.gmra.mxu0 %v206
        %v243 = vpop.f32.mrf.mxu0
        %v244 = vadd.f32 0.0, %v243
        %245 = vdwg.mxu0
        %v246 = vpack.c.bf16 %v241, %v241
        %v247 = vpack.c.bf16 %v244, %v244
        %248 = vst [vmem:[%s202] sm:$0xf] %v246
        %249 = vst [vmem:[%s202 + $0x4] sm:$0xf] %v247
        %s250 = sand.u32 %s94, 1
        %s251 = scalar_lea.sflag [#allocation4], %s250
        %s252 = sand.u32 %s94, 1
        %s253 = smul.addr %s252, 8
        %s254 = scalar_lea.vmem [#allocation7], %s253
        // Predicated region
        $region37: #{tpu_custom_call.1} parent=27 // pred_check
          %p255 = pneg %p104
        $region38: #{tpu_custom_call.1} parent=27 // pred_check_branch
          %257 = sbr.rel (%p255) target = $region40
        $region39: #{tpu_custom_call.1} parent=27 // pred_region
          %s258 = smul.u32 2, %s24
          %260 = vsyncadd %s251, 0
          %s261 = smul.addr %s25, 2
          %s262 = sadd.s32 %s258, %s261
          %s263 = smul.addr %s262, 4
          %s264 = scalar_lea.hbm %s2, %s263
          %s265 = sshll.u32 %s254, 4
          %s266 = int_to_ptr.vmem [resolvable:$true] %s265
          %s267 = sshll.u32 %s264, 4
          %s268 = int_to_ptr.hbm [resolvable:$true] %s267
          %273 = dma.vmem_to_hbm [thread:$0]  %s266, 128, %s268, %s251, 64, 64, 4
        $region40: #{tpu_custom_call.1} parent=27 // pred_fallthru
          _
      $region28: #{tpu_custom_call.1} parent=5 // pred_fallthru
        _
      %p274 = scmp.le.s32.totalorder 2, %s15
      // Predicated region
      $region41: #{tpu_custom_call.1} parent=5 // pred_check
        %p275 = pneg %p274
      $region42: #{tpu_custom_call.1} parent=5 // pred_check_branch
        %277 = sbr.rel (%p275) target = $region44
      $region43: #{tpu_custom_call.1} parent=5 // pred_region
        %s278 = ssub.s32 %s15, 2
        // Predicated region
        $region45: #{tpu_custom_call.1} parent=43 // pred_check
          %p279 = pneg %p110
        $region46: #{tpu_custom_call.1} parent=43 // pred_check_branch
          %281 = sbr.rel (%p279) target = $region48
        $region47: #{tpu_custom_call.1} parent=43 // pred_region
          %s282 = sand.u32 %s95, 1
          %s283 = scalar_lea.sflag [#allocation4], %s282
          %s284 = sand.u32 %s95, 1
          %s285 = smul.addr %s284, 8
          %s286 = scalar_lea.vmem [#allocation7], %s285
          %288 = dma.done %s283, 128
        $region48: #{tpu_custom_call.1} parent=43 // pred_fallthru
          _
      $region44: #{tpu_custom_call.1} parent=5 // pred_fallthru
        _
    $region6: #{tpu_custom_call.1} parent=1 // loop_footer
      %s19 = sadd.s32 1, %s15
    $region7: #{tpu_custom_call.1} parent=1 // loop_footer_branch
      %14 = sbr.rel target = $region3
    $region8: #{tpu_custom_call.1} parent=1 // loop_exit
      _
    %289 = vsyncpa [#allocation3], 1
    %s290 = scalar_lea.sflag [#allocation3], 1
    %291 = vsyncpa %s290, 1
    %292 = vsyncpa [#allocation6], 1
    %s293 = scalar_lea.sflag [#allocation6], 1
    %294 = vsyncpa %s293, 1
    %295 = vsyncpa [#allocation4], 1
    %s296 = scalar_lea.sflag [#allocation4], 1
    %297 = vsyncpa %s296, 1

</llo_original>
